<compile_context>
chip_gen: v5e
topology: v5e:2x2
jax: 0.10.0
libtpu: 0.0.40
codegen_flags: <defaults>
</compile_context>

<pallas_src>
import functools

import jax
import jax.numpy as jnp
from jax import lax
from jax.experimental import pallas as pl
from jax.experimental.pallas import tpu as pltpu

F1_PAD = 128                 # layer-1 out_channels (64) zero-padded to a lane multiple
TM_TARGET = 256              # dst-row tile: 256 matches v6e/v7x 2x256^2 MXU (use 128 on v5e)
VMEM_LIMIT = 64 * 1024 * 1024  # explicit scoped-VMEM limit (default is 16/32 MiB)


def _round_up(n, m):
    return (n + m - 1) // m * m


def _pick_tiling(n):
    """Padded node count and dst-row tile size (static, from shapes)."""
    if n <= TM_TARGET:
        n_pad = _round_up(n, 8)
        return n_pad, n_pad           # single tile
    n_pad = _round_up(n, TM_TARGET)
    return n_pad, TM_TARGET


# ----------------------------- kernels --------------------------------------


def _proj_kernel(x_ref, w_ref, asrc_ref, adst_ref, h_ref, ssrc_ref, sdst_ref):
    """Node-tile linear projection + per-node attention score halves."""
    # h[j] = W^T x[j]   (PyG lin_src, bias=False; shared for src and dst)
    h = jnp.dot(x_ref[...], w_ref[...], preferred_element_type=jnp.float32)
    # score halves computed once per node from the f32 accumulator
    ssrc_ref[...] = jnp.sum(h * asrc_ref[...], axis=-1, keepdims=True)   # [TM, 1]
    sdst_ref[...] = jnp.sum(h * adst_ref[...], axis=-1, keepdims=True)   # [TM, 1]
    h_ref[...] = h.astype(h_ref.dtype)                                   # bf16 out


def _attn_kernel(sdst_ref, ssrc_ref, h_ref, eattr_ref, b_ref, ce_ref, out_ref,
                 *, relu, negative_slope=0.2):
    """Dst-row-tile attention softmax + aggregation (one tile per grid step)."""
    tm, n = eattr_ref.shape
    e = eattr_ref[...].astype(jnp.float32)                               # [TM, N]
    # Edge mask from the dense edge-attr tile: an off-diagonal edge exists iff
    # its attr is nonzero (to_sparse drops zeros); self-loops (diag) always valid.
    rows = pl.program_id(0) * tm + lax.broadcasted_iota(jnp.int32, (tm, n), 0)
    cols = lax.broadcasted_iota(jnp.int32, (tm, n), 1)
    neg_bias = jnp.where((e != 0.0) | (rows == cols), 0.0, -1e30)        # one select
    # logit(j -> i) = a_dst.h[i] + a_src.h[j] + a_edge.lin_edge(e[i, j])
    logits = sdst_ref[...] + ssrc_ref[...] + ce_ref[0] * e               # [TM, N] f32
    logits = jnp.where(logits > 0.0, logits, negative_slope * logits) + neg_bias
    # masked softmax over source nodes j (per destination row i); the self-loop
    # guarantees at least one valid entry per real row.  f32 path on purpose
    # (v5e VPU/EUP have no bf16).
    m = jnp.max(logits, axis=-1, keepdims=True)
    p = jnp.exp(logits - m)                   # masked entries underflow to 0
    denom = jnp.sum(p, axis=-1, keepdims=True)
    alpha = (p * pl.reciprocal(denom, approx=True)).astype(jnp.bfloat16)  # [TM, N]
    out = jnp.dot(alpha, h_ref[...], preferred_element_type=jnp.float32) + b_ref[...]
    if relu:
        out = jnp.maximum(out, 0.0)
    out_ref[...] = out.astype(out_ref.dtype)


# --------------------------- layer wrapper -----------------------------------


def gat_layer(x_bf16, w_bf16, att_src, att_dst, bias, ce, eattr_bf16, tm,
              *, relu, out_dtype):
    """One GATConv layer = projection pass + attention/aggregation pass."""
    n_pad, f_in = x_bf16.shape
    f_out = w_bf16.shape[1]
    n_tiles = n_pad // tm
    params = pltpu.CompilerParams(
        dimension_semantics=("parallel",),       # independent tiles -> megacore on v7x
        vmem_limit_bytes=VMEM_LIMIT)

    # Pass 1: node-wise projection + per-node score halves (tiled over node rows).
    h, ssrc_col, sdst_col = pl.pallas_call(
        _proj_kernel,
        out_shape=(jax.ShapeDtypeStruct((n_pad, f_out), jnp.bfloat16),
                   jax.ShapeDtypeStruct((n_pad, 1), jnp.float32),
                   jax.ShapeDtypeStruct((n_pad, 1), jnp.float32)),
        grid=(n_tiles,),
        in_specs=[
            pl.BlockSpec((tm, f_in), lambda i: (i, 0)),       # x tile
            pl.BlockSpec((f_in, f_out), lambda i: (0, 0)),    # W (bf16, pre-cast)
            pl.BlockSpec((1, f_out), lambda i: (0, 0)),       # att_src
            pl.BlockSpec((1, f_out), lambda i: (0, 0)),       # att_dst
        ],
        out_specs=(
            pl.BlockSpec((tm, f_out), lambda i: (i, 0)),      # h (bf16)
            pl.BlockSpec((tm, 1), lambda i: (i, 0)),          # s_src per node
            pl.BlockSpec((tm, 1), lambda i: (i, 0)),          # s_dst per node
        ),
        compiler_params=params,
    )(x_bf16, w_bf16, att_src, att_dst)

    ssrc_row = ssrc_col.reshape(1, n_pad)   # dst-tile-invariant [1, N] source row

    # Pass 2: attention softmax + aggregation, tiled over destination rows.
    # TODO(synk): dst-tile-invariant inputs (ssrc_row, h, bias) could use
    # pipeline_mode=pl.Buffered(1) to drop their second VMEM buffer.
    out = pl.pallas_call(
        functools.partial(_attn_kernel, relu=relu),
        out_shape=jax.ShapeDtypeStruct((n_pad, f_out), out_dtype),
        grid=(n_tiles,),
        in_specs=[
            pl.BlockSpec((tm, 1), lambda i: (i, 0)),          # s_dst tile
            pl.BlockSpec((1, n_pad), lambda i: (0, 0)),       # s_src row (invariant)
            pl.BlockSpec((n_pad, f_out), lambda i: (0, 0)),   # h of all source nodes
            pl.BlockSpec((tm, n_pad), lambda i: (i, 0)),      # eattr dst tile (bf16)
            pl.BlockSpec((1, f_out), lambda i: (0, 0)),       # bias
            pl.BlockSpec(memory_space=pltpu.SMEM),            # ce scalar, shape (1,)
        ],
        out_specs=pl.BlockSpec((tm, f_out), lambda i: (i, 0)),
        compiler_params=params,
    )(sdst_col, ssrc_row, h, eattr_bf16, bias, ce)
    return out


# ------------------------------ glue (plain JAX) ------------------------------


def build_dense_eattr(graph_attr):
    """Dense [dst, src] edge-attr matrix equivalent to: to_sparse().coalesce()
    edges + remove_self_loops + add_self_loops(fill_value='mean') as done
    inside PyG GATConv.  Zero off-diagonal entries mean 'no edge'."""
    a = jnp.nan_to_num(graph_attr)
    n = a.shape[0]
    eye = jnp.eye(n, dtype=bool)
    at = a.T                                  # at[i, j] = attr of edge j -> i
    off_mask = (at != 0.0) & (~eye)           # existing non-self-loop edges
    cnt = jnp.sum(off_mask, axis=1)
    # self-loop attr = mean of incoming edge attrs (0 if a node has none)
    loop_val = jnp.where(
        cnt > 0,
        jnp.sum(jnp.where(off_mask, at, 0.0), axis=1) / jnp.maximum(cnt, 1),
        0.0)
    return jnp.where(off_mask, at, 0.0) + jnp.diag(loop_val)


def init_gat_params(key, f_in, f_out, scale=0.1):
    k = jax.random.split(key, 6)
    w = scale * jax.random.normal(k[0], (f_in, f_out), jnp.float32)  # lin_src.weight^T
    att_src = scale * jax.random.normal(k[1], (1, f_out), jnp.float32)
    att_dst = scale * jax.random.normal(k[2], (1, f_out), jnp.float32)
    bias = scale * jax.random.normal(k[3], (1, f_out), jnp.float32)
    w_edge = scale * jax.random.normal(k[4], (f_out,), jnp.float32)  # lin_edge (edge_dim=1)
    att_edge = scale * jax.random.normal(k[5], (f_out,), jnp.float32)
    # scalar edge-attention coefficient: att_edge . (e * w_edge) = ce * e
    ce = jnp.sum(w_edge * att_edge, dtype=jnp.float32)
    return dict(w=w, att_src=att_src, att_dst=att_dst, bias=bias, ce=ce)


def _pad_cols(a, to):
    return jnp.pad(a, ((0, 0), (0, to - a.shape[-1])))


@jax.jit
def gat_model(graph_x, graph_attr, p1, p2):
    x = jnp.nan_to_num(graph_x)
    eattr = build_dense_eattr(graph_attr)

    n = x.shape[0]
    n_pad, tm = _pick_tiling(n)
    pad = n_pad - n
    x = jnp.pad(x, ((0, pad), (0, 0)))
    # bf16 halves the only O(N^2) HBM stream; exact zeros (== "no edge") survive,
    # and padded rows/cols are zero (=> masked, except the inert padded diag).
    eattr16 = jnp.pad(eattr, ((0, pad), (0, pad))).astype(jnp.bfloat16)

    # Layer-1 width zero-padded 64 -> 128 (lane-dense, mathematically inert);
    # weights and activations pre-cast to bf16 so kernels feed the MXU directly.
    w1 = _pad_cols(p1["w"], F1_PAD).astype(jnp.bfloat16)
    asrc1 = _pad_cols(p1["att_src"], F1_PAD)
    adst1 = _pad_cols(p1["att_dst"], F1_PAD)
    b1 = _pad_cols(p1["bias"], F1_PAD)
    w2 = jnp.pad(p2["w"], ((0, F1_PAD - p2["w"].shape[0]), (0, 0))).astype(jnp.bfloat16)

    h1 = gat_layer(x.astype(jnp.bfloat16), w1, asrc1, adst1, b1,
                   p1["ce"].reshape(1), eattr16, tm,
                   relu=True, out_dtype=jnp.bfloat16)
    # TODO(synk): F.dropout(p=0.5) between layers implemented as identity (inference mode).
    out = gat_layer(h1, w2, p2["att_src"], p2["att_dst"], p2["bias"],
                    p2["ce"].reshape(1), eattr16, tm,
                    relu=False, out_dtype=jnp.float32)
    return out[:n]


if __name__ == "__main__":
    N = 16            # number of graph nodes
    IN_CHANNELS = 8   # node feature dim

    key = jax.random.PRNGKey(0)
    kx, ka, kp1, kp2, ks = jax.random.split(key, 5)

    graph_x = jax.random.normal(kx, (N, IN_CHANNELS), jnp.float32)
    # sparse-ish dense adjacency with a NaN to exercise nan_to_num
    raw = jax.random.uniform(ka, (N, N), jnp.float32)
    keep = jax.random.uniform(ks, (N, N)) > 0.6
    graph_attr = jnp.where(keep, raw, 0.0)
    graph_attr = graph_attr.at[0, 1].set(jnp.nan)

    params1 = init_gat_params(kp1, IN_CHANNELS, 64)
    params2 = init_gat_params(kp2, 64, 512)

    out = gat_model(graph_x, graph_attr, params1, params2)
    out = jax.block_until_ready(out)
    assert out.shape == (N, 512) and out.dtype == jnp.float32
    assert bool(jnp.all(jnp.isfinite(out)))
    print("KERNEL_OK")
</pallas_src>

<mosaic_0001>
module attributes {stable_mosaic.version = 11 : i64} {
  func.func @_attn_kernel(%arg0: i32, %arg1: memref<16x1xf32, #tpu.memory_space<vmem>>, %arg2: memref<1x16xf32, #tpu.memory_space<vmem>>, %arg3: memref<16x128xbf16, #tpu.memory_space<vmem>>, %arg4: memref<16x16xbf16, #tpu.memory_space<vmem>>, %arg5: memref<1x128xf32, #tpu.memory_space<vmem>>, %arg6: memref<1xf32, #tpu.memory_space<smem>>, %arg7: memref<16x128xbf16, #tpu.memory_space<vmem>>) attributes {dimension_semantics = [#tpu.dimension_semantics<parallel>], iteration_bounds = array<i64: 1>, scalar_prefetch = 0 : i64, scratch_operands = 0 : i64, tpu.core_type = #tpu.core_type<tc>, window_params = [{transform_indices = @transform_0, window_bounds = array<i64: 16, 1>}, {pipeline_mode = #tpu.pipeline_mode<synchronous>, transform_indices = @transform_1, window_bounds = array<i64: 1, 16>}, {pipeline_mode = #tpu.pipeline_mode<synchronous>, transform_indices = @transform_2, window_bounds = array<i64: 16, 128>}, {transform_indices = @transform_3, window_bounds = array<i64: 16, 16>}, {pipeline_mode = #tpu.pipeline_mode<synchronous>, transform_indices = @transform_4, window_bounds = array<i64: 1, 128>}, {transform_indices = @transform_5, window_bounds = array<i64: 1>}, {transform_indices = @transform_6, window_bounds = array<i64: 16, 128>}]} {
    %c0 = arith.constant 0 : index
    %c0_0 = arith.constant 0 : index
    %0 = vector.load %arg4[%c0, %c0_0] : memref<16x16xbf16, #tpu.memory_space<vmem>>, vector<16x16xbf16>
    %1 = arith.extf %0 : vector<16x16xbf16> to vector<16x16xf32>
    %c16_i32 = arith.constant 16 : i32
    %2 = arith.muli %arg0, %c16_i32 : i32
    %3 = tpu.iota {dimensions = array<i32: 0>} : vector<16x16xi32>
    %4 = vector.broadcast %2 : i32 to vector<16x16xi32>
    %5 = arith.addi %4, %3 : vector<16x16xi32>
    %6 = tpu.iota {dimensions = array<i32: 1>} : vector<16x16xi32>
    %cst = arith.constant 0.000000e+00 : f32
    %7 = vector.broadcast %cst : f32 to vector<16x16xf32>
    %8 = arith.cmpf one, %1, %7 : vector<16x16xf32>
    %9 = arith.cmpi eq, %5, %6 : vector<16x16xi32>
    %10 = arith.ori %8, %9 : vector<16x16xi1>
    %cst_1 = arith.constant 0.000000e+00 : f32
    %cst_2 = arith.constant -1.000000e+30 : f32
    %11 = vector.broadcast %cst_1 : f32 to vector<16x16xf32>
    %12 = vector.broadcast %cst_2 : f32 to vector<16x16xf32>
    %13 = arith.select %10, %11, %12 : vector<16x16xi1>, vector<16x16xf32>
    %c0_3 = arith.constant 0 : index
    %c0_4 = arith.constant 0 : index
    %14 = vector.load %arg1[%c0_3, %c0_4] : memref<16x1xf32, #tpu.memory_space<vmem>>, vector<16x1xf32>
    %c0_5 = arith.constant 0 : index
    %c0_6 = arith.constant 0 : index
    %15 = vector.load %arg2[%c0_5, %c0_6] : memref<1x16xf32, #tpu.memory_space<vmem>>, vector<1x16xf32>
    %16 = vector.broadcast %14 : vector<16x1xf32> to vector<16x16xf32>
    %17 = vector.broadcast %15 : vector<1x16xf32> to vector<16x16xf32>
    %18 = arith.addf %16, %17 : vector<16x16xf32>
    %c0_7 = arith.constant 0 : index
    %19 = memref.load %arg6[%c0_7] : memref<1xf32, #tpu.memory_space<smem>>
    %20 = vector.broadcast %19 : f32 to vector<16x16xf32>
    %21 = arith.mulf %20, %1 : vector<16x16xf32>
    %22 = arith.addf %18, %21 : vector<16x16xf32>
    %cst_8 = arith.constant 0.000000e+00 : f32
    %23 = vector.broadcast %cst_8 : f32 to vector<16x16xf32>
    %24 = arith.cmpf ogt, %22, %23 : vector<16x16xf32>
    %cst_9 = arith.constant 2.000000e-01 : f32
    %25 = vector.broadcast %cst_9 : f32 to vector<16x16xf32>
    %26 = arith.mulf %25, %22 : vector<16x16xf32>
    %27 = arith.select %24, %22, %26 : vector<16x16xi1>, vector<16x16xf32>
    %28 = arith.addf %27, %13 : vector<16x16xf32>
    %cst_10 = arith.constant dense<0xFF800000> : vector<16xf32>
    %29 = vector.multi_reduction <maximumf>, %28, %cst_10 [1] : vector<16x16xf32> to vector<16xf32>
    %30 = vector.shape_cast %29 : vector<16xf32> to vector<16x1xf32>
    %31 = vector.broadcast %30 : vector<16x1xf32> to vector<16x16xf32>
    %32 = arith.subf %28, %31 : vector<16x16xf32>
    %33 = math.exp %32 : vector<16x16xf32>
    %cst_11 = arith.constant dense<0.000000e+00> : vector<16xf32>
    %34 = vector.multi_reduction <add>, %33, %cst_11 [1] : vector<16x16xf32> to vector<16xf32>
    %35 = vector.shape_cast %34 : vector<16xf32> to vector<16x1xf32>
    %36 = tpu.reciprocal %35 {approx = true} : vector<16x1xf32> -> vector<16x1xf32>
    %37 = vector.broadcast %36 : vector<16x1xf32> to vector<16x16xf32>
    %38 = arith.mulf %33, %37 : vector<16x16xf32>
    %39 = arith.truncf %38 : vector<16x16xf32> to vector<16x16xbf16>
    %c0_12 = arith.constant 0 : index
    %c0_13 = arith.constant 0 : index
    %40 = vector.load %arg3[%c0_12, %c0_13] : memref<16x128xbf16, #tpu.memory_space<vmem>>, vector<16x128xbf16>
    %cst_14 = arith.constant dense<0.000000e+00> : vector<16x128xf32>
    %41 = tpu.matmul %39, %40, %cst_14 {dimension_numbers = #tpu.dot_dimension_numbers<[1], [0], [0], [1], [0, 0, 1, 1], [], []>} : vector<16x16xbf16>, vector<16x128xbf16>, vector<16x128xf32> -> vector<16x128xf32>
    %c0_15 = arith.constant 0 : index
    %c0_16 = arith.constant 0 : index
    %42 = vector.load %arg5[%c0_15, %c0_16] : memref<1x128xf32, #tpu.memory_space<vmem>>, vector<1x128xf32>
    %43 = vector.broadcast %42 : vector<1x128xf32> to vector<16x128xf32>
    %44 = arith.addf %41, %43 : vector<16x128xf32>
    %cst_17 = arith.constant 0.000000e+00 : f32
    %45 = vector.broadcast %cst_17 : f32 to vector<16x128xf32>
    %46 = arith.maximumf %44, %45 : vector<16x128xf32>
    %47 = arith.truncf %46 : vector<16x128xf32> to vector<16x128xbf16>
    %c0_18 = arith.constant 0 : index
    %c0_19 = arith.constant 0 : index
    %48 = vector.load %arg7[%c0_18, %c0_19] : memref<16x128xbf16, #tpu.memory_space<vmem>>, vector<16x128xbf16>
    tpu.vector_store %arg7[%c0_18, %c0_19], %47 {strides = array<i32>} : memref<16x128xbf16, #tpu.memory_space<vmem>>, vector<16x128xbf16>,
    return
  }
  func.func @transform_0(%arg0: i32) -> (i32, i32) {
    %c0_i32 = arith.constant 0 : i32
    %c0_i32_0 = arith.constant 0 : i32
    return %arg0, %c0_i32 : i32, i32
  }
  func.func @transform_1(%arg0: i32) -> (i32, i32) {
    %c0_i32 = arith.constant 0 : i32
    %c0_i32_0 = arith.constant 0 : i32
    %c0_i32_1 = arith.constant 0 : i32
    return %c0_i32, %c0_i32_0 : i32, i32
  }
  func.func @transform_2(%arg0: i32) -> (i32, i32) {
    %c0_i32 = arith.constant 0 : i32
    %c0_i32_0 = arith.constant 0 : i32
    %c0_i32_1 = arith.constant 0 : i32
    return %c0_i32, %c0_i32_0 : i32, i32
  }
  func.func @transform_3(%arg0: i32) -> (i32, i32) {
    %c0_i32 = arith.constant 0 : i32
    %c0_i32_0 = arith.constant 0 : i32
    return %arg0, %c0_i32 : i32, i32
  }
  func.func @transform_4(%arg0: i32) -> (i32, i32) {
    %c0_i32 = arith.constant 0 : i32
    %c0_i32_0 = arith.constant 0 : i32
    %c0_i32_1 = arith.constant 0 : i32
    return %c0_i32, %c0_i32_0 : i32, i32
  }
  func.func @transform_5(%arg0: i32) -> i32 {
    %c0_i32 = arith.constant 0 : i32
    %c0_i32_0 = arith.constant 0 : i32
    return %c0_i32 : i32
  }
  func.func @transform_6(%arg0: i32) -> (i32, i32) {
    %c0_i32 = arith.constant 0 : i32
    %c0_i32_0 = arith.constant 0 : i32
    return %arg0, %c0_i32 : i32, i32
  }
}

module attributes {stable_mosaic.version = 11 : i64} {
  func.func @_proj_kernel(%arg0: i32, %arg1: memref<16x8xbf16, #tpu.memory_space<vmem>>, %arg2: memref<8x128xbf16, #tpu.memory_space<vmem>>, %arg3: memref<1x128xf32, #tpu.memory_space<vmem>>, %arg4: memref<1x128xf32, #tpu.memory_space<vmem>>, %arg5: memref<16x128xbf16, #tpu.memory_space<vmem>>, %arg6: memref<16x1xf32, #tpu.memory_space<vmem>>, %arg7: memref<16x1xf32, #tpu.memory_space<vmem>>) attributes {dimension_semantics = [#tpu.dimension_semantics<parallel>], iteration_bounds = array<i64: 1>, scalar_prefetch = 0 : i64, scratch_operands = 0 : i64, tpu.core_type = #tpu.core_type<tc>, window_params = [{transform_indices = @transform_0, window_bounds = array<i64: 16, 8>}, {pipeline_mode = #tpu.pipeline_mode<synchronous>, transform_indices = @transform_1, window_bounds = array<i64: 8, 128>}, {pipeline_mode = #tpu.pipeline_mode<synchronous>, transform_indices = @transform_2, window_bounds = array<i64: 1, 128>}, {pipeline_mode = #tpu.pipeline_mode<synchronous>, transform_indices = @transform_3, window_bounds = array<i64: 1, 128>}, {transform_indices = @transform_4, window_bounds = array<i64: 16, 128>}, {transform_indices = @transform_5, window_bounds = array<i64: 16, 1>}, {transform_indices = @transform_6, window_bounds = array<i64: 16, 1>}]} {
    %c0 = arith.constant 0 : index
    %c0_0 = arith.constant 0 : index
    %0 = vector.load %arg1[%c0, %c0_0] : memref<16x8xbf16, #tpu.memory_space<vmem>>, vector<16x8xbf16>
    %c0_1 = arith.constant 0 : index
    %c0_2 = arith.constant 0 : index
    %1 = vector.load %arg2[%c0_1, %c0_2] : memref<8x128xbf16, #tpu.memory_space<vmem>>, vector<8x128xbf16>
    %cst = arith.constant dense<0.000000e+00> : vector<16x128xf32>
    %2 = tpu.matmul %0, %1, %cst {dimension_numbers = #tpu.dot_dimension_numbers<[1], [0], [0], [1], [0, 0, 1, 1], [], []>} : vector<16x8xbf16>, vector<8x128xbf16>, vector<16x128xf32> -> vector<16x128xf32>
    %c0_3 = arith.constant 0 : index
    %c0_4 = arith.constant 0 : index
    %3 = vector.load %arg3[%c0_3, %c0_4] : memref<1x128xf32, #tpu.memory_space<vmem>>, vector<1x128xf32>
    %4 = vector.broadcast %3 : vector<1x128xf32> to vector<16x128xf32>
    %5 = arith.mulf %2, %4 : vector<16x128xf32>
    %cst_5 = arith.constant dense<0.000000e+00> : vector<16xf32>
    %6 = vector.multi_reduction <add>, %5, %cst_5 [1] : vector<16x128xf32> to vector<16xf32>
    %7 = vector.shape_cast %6 : vector<16xf32> to vector<16x1xf32>
    %c0_6 = arith.constant 0 : index
    %c0_7 = arith.constant 0 : index
    %8 = vector.load %arg6[%c0_6, %c0_7] : memref<16x1xf32, #tpu.memory_space<vmem>>, vector<16x1xf32>
    tpu.vector_store %arg6[%c0_6, %c0_7], %7 {strides = array<i32>} : memref<16x1xf32, #tpu.memory_space<vmem>>, vector<16x1xf32>,
    %c0_8 = arith.constant 0 : index
    %c0_9 = arith.constant 0 : index
    %9 = vector.load %arg4[%c0_8, %c0_9] : memref<1x128xf32, #tpu.memory_space<vmem>>, vector<1x128xf32>
    %10 = vector.broadcast %9 : vector<1x128xf32> to vector<16x128xf32>
    %11 = arith.mulf %2, %10 : vector<16x128xf32>
    %cst_10 = arith.constant dense<0.000000e+00> : vector<16xf32>
    %12 = vector.multi_reduction <add>, %11, %cst_10 [1] : vector<16x128xf32> to vector<16xf32>
    %13 = vector.shape_cast %12 : vector<16xf32> to vector<16x1xf32>
    %c0_11 = arith.constant 0 : index
    %c0_12 = arith.constant 0 : index
    %14 = vector.load %arg7[%c0_11, %c0_12] : memref<16x1xf32, #tpu.memory_space<vmem>>, vector<16x1xf32>
    tpu.vector_store %arg7[%c0_11, %c0_12], %13 {strides = array<i32>} : memref<16x1xf32, #tpu.memory_space<vmem>>, vector<16x1xf32>,
    %15 = arith.truncf %2 : vector<16x128xf32> to vector<16x128xbf16>
    %c0_13 = arith.constant 0 : index
    %c0_14 = arith.constant 0 : index
    %16 = vector.load %arg5[%c0_13, %c0_14] : memref<16x128xbf16, #tpu.memory_space<vmem>>, vector<16x128xbf16>
    tpu.vector_store %arg5[%c0_13, %c0_14], %15 {strides = array<i32>} : memref<16x128xbf16, #tpu.memory_space<vmem>>, vector<16x128xbf16>,
    return
  }
  func.func @transform_0(%arg0: i32) -> (i32, i32) {
    %c0_i32 = arith.constant 0 : i32
    %c0_i32_0 = arith.constant 0 : i32
    return %arg0, %c0_i32 : i32, i32
  }
  func.func @transform_1(%arg0: i32) -> (i32, i32) {
    %c0_i32 = arith.constant 0 : i32
    %c0_i32_0 = arith.constant 0 : i32
    %c0_i32_1 = arith.constant 0 : i32
    return %c0_i32, %c0_i32_0 : i32, i32
  }
  func.func @transform_2(%arg0: i32) -> (i32, i32) {
    %c0_i32 = arith.constant 0 : i32
    %c0_i32_0 = arith.constant 0 : i32
    %c0_i32_1 = arith.constant 0 : i32
    return %c0_i32, %c0_i32_0 : i32, i32
  }
  func.func @transform_3(%arg0: i32) -> (i32, i32) {
    %c0_i32 = arith.constant 0 : i32
    %c0_i32_0 = arith.constant 0 : i32
    %c0_i32_1 = arith.constant 0 : i32
    return %c0_i32, %c0_i32_0 : i32, i32
  }
  func.func @transform_4(%arg0: i32) -> (i32, i32) {
    %c0_i32 = arith.constant 0 : i32
    %c0_i32_0 = arith.constant 0 : i32
    return %arg0, %c0_i32 : i32, i32
  }
  func.func @transform_5(%arg0: i32) -> (i32, i32) {
    %c0_i32 = arith.constant 0 : i32
    %c0_i32_0 = arith.constant 0 : i32
    return %arg0, %c0_i32 : i32, i32
  }
  func.func @transform_6(%arg0: i32) -> (i32, i32) {
    %c0_i32 = arith.constant 0 : i32
    %c0_i32_0 = arith.constant 0 : i32
    return %arg0, %c0_i32 : i32, i32
  }
}

module attributes {stable_mosaic.version = 11 : i64} {
  func.func @_proj_kernel(%arg0: i32, %arg1: memref<16x128xbf16, #tpu.memory_space<vmem>>, %arg2: memref<128x512xbf16, #tpu.memory_space<vmem>>, %arg3: memref<1x512xf32, #tpu.memory_space<vmem>>, %arg4: memref<1x512xf32, #tpu.memory_space<vmem>>, %arg5: memref<16x512xbf16, #tpu.memory_space<vmem>>, %arg6: memref<16x1xf32, #tpu.memory_space<vmem>>, %arg7: memref<16x1xf32, #tpu.memory_space<vmem>>) attributes {dimension_semantics = [#tpu.dimension_semantics<parallel>], iteration_bounds = array<i64: 1>, scalar_prefetch = 0 : i64, scratch_operands = 0 : i64, tpu.core_type = #tpu.core_type<tc>, window_params = [{transform_indices = @transform_0, window_bounds = array<i64: 16, 128>}, {pipeline_mode = #tpu.pipeline_mode<synchronous>, transform_indices = @transform_1, window_bounds = array<i64: 128, 512>}, {pipeline_mode = #tpu.pipeline_mode<synchronous>, transform_indices = @transform_2, window_bounds = array<i64: 1, 512>}, {pipeline_mode = #tpu.pipeline_mode<synchronous>, transform_indices = @transform_3, window_bounds = array<i64: 1, 512>}, {transform_indices = @transform_4, window_bounds = array<i64: 16, 512>}, {transform_indices = @transform_5, window_bounds = array<i64: 16, 1>}, {transform_indices = @transform_6, window_bounds = array<i64: 16, 1>}]} {
    %c0 = arith.constant 0 : index
    %c0_0 = arith.constant 0 : index
    %0 = vector.load %arg1[%c0, %c0_0] : memref<16x128xbf16, #tpu.memory_space<vmem>>, vector<16x128xbf16>
    %c0_1 = arith.constant 0 : index
    %c0_2 = arith.constant 0 : index
    %1 = vector.load %arg2[%c0_1, %c0_2] : memref<128x512xbf16, #tpu.memory_space<vmem>>, vector<128x512xbf16>
    %cst = arith.constant dense<0.000000e+00> : vector<16x512xf32>
    %2 = tpu.matmul %0, %1, %cst {dimension_numbers = #tpu.dot_dimension_numbers<[1], [0], [0], [1], [0, 0, 1, 1], [], []>} : vector<16x128xbf16>, vector<128x512xbf16>, vector<16x512xf32> -> vector<16x512xf32>
    %c0_3 = arith.constant 0 : index
    %c0_4 = arith.constant 0 : index
    %3 = vector.load %arg3[%c0_3, %c0_4] : memref<1x512xf32, #tpu.memory_space<vmem>>, vector<1x512xf32>
    %4 = vector.broadcast %3 : vector<1x512xf32> to vector<16x512xf32>
    %5 = arith.mulf %2, %4 : vector<16x512xf32>
    %cst_5 = arith.constant dense<0.000000e+00> : vector<16xf32>
    %6 = vector.multi_reduction <add>, %5, %cst_5 [1] : vector<16x512xf32> to vector<16xf32>
    %7 = vector.shape_cast %6 : vector<16xf32> to vector<16x1xf32>
    %c0_6 = arith.constant 0 : index
    %c0_7 = arith.constant 0 : index
    %8 = vector.load %arg6[%c0_6, %c0_7] : memref<16x1xf32, #tpu.memory_space<vmem>>, vector<16x1xf32>
    tpu.vector_store %arg6[%c0_6, %c0_7], %7 {strides = array<i32>} : memref<16x1xf32, #tpu.memory_space<vmem>>, vector<16x1xf32>,
    %c0_8 = arith.constant 0 : index
    %c0_9 = arith.constant 0 : index
    %9 = vector.load %arg4[%c0_8, %c0_9] : memref<1x512xf32, #tpu.memory_space<vmem>>, vector<1x512xf32>
    %10 = vector.broadcast %9 : vector<1x512xf32> to vector<16x512xf32>
    %11 = arith.mulf %2, %10 : vector<16x512xf32>
    %cst_10 = arith.constant dense<0.000000e+00> : vector<16xf32>
    %12 = vector.multi_reduction <add>, %11, %cst_10 [1] : vector<16x512xf32> to vector<16xf32>
    %13 = vector.shape_cast %12 : vector<16xf32> to vector<16x1xf32>
    %c0_11 = arith.constant 0 : index
    %c0_12 = arith.constant 0 : index
    %14 = vector.load %arg7[%c0_11, %c0_12] : memref<16x1xf32, #tpu.memory_space<vmem>>, vector<16x1xf32>
    tpu.vector_store %arg7[%c0_11, %c0_12], %13 {strides = array<i32>} : memref<16x1xf32, #tpu.memory_space<vmem>>, vector<16x1xf32>,
    %15 = arith.truncf %2 : vector<16x512xf32> to vector<16x512xbf16>
    %c0_13 = arith.constant 0 : index
    %c0_14 = arith.constant 0 : index
    %16 = vector.load %arg5[%c0_13, %c0_14] : memref<16x512xbf16, #tpu.memory_space<vmem>>, vector<16x512xbf16>
    tpu.vector_store %arg5[%c0_13, %c0_14], %15 {strides = array<i32>} : memref<16x512xbf16, #tpu.memory_space<vmem>>, vector<16x512xbf16>,
    return
  }
  func.func @transform_0(%arg0: i32) -> (i32, i32) {
    %c0_i32 = arith.constant 0 : i32
    %c0_i32_0 = arith.constant 0 : i32
    return %arg0, %c0_i32 : i32, i32
  }
  func.func @transform_1(%arg0: i32) -> (i32, i32) {
    %c0_i32 = arith.constant 0 : i32
    %c0_i32_0 = arith.constant 0 : i32
    %c0_i32_1 = arith.constant 0 : i32
    return %c0_i32, %c0_i32_0 : i32, i32
  }
  func.func @transform_2(%arg0: i32) -> (i32, i32) {
    %c0_i32 = arith.constant 0 : i32
    %c0_i32_0 = arith.constant 0 : i32
    %c0_i32_1 = arith.constant 0 : i32
    return %c0_i32, %c0_i32_0 : i32, i32
  }
  func.func @transform_3(%arg0: i32) -> (i32, i32) {
    %c0_i32 = arith.constant 0 : i32
    %c0_i32_0 = arith.constant 0 : i32
    %c0_i32_1 = arith.constant 0 : i32
    return %c0_i32, %c0_i32_0 : i32, i32
  }
  func.func @transform_4(%arg0: i32) -> (i32, i32) {
    %c0_i32 = arith.constant 0 : i32
    %c0_i32_0 = arith.constant 0 : i32
    return %arg0, %c0_i32 : i32, i32
  }
  func.func @transform_5(%arg0: i32) -> (i32, i32) {
    %c0_i32 = arith.constant 0 : i32
    %c0_i32_0 = arith.constant 0 : i32
    return %arg0, %c0_i32 : i32, i32
  }
  func.func @transform_6(%arg0: i32) -> (i32, i32) {
    %c0_i32 = arith.constant 0 : i32
    %c0_i32_0 = arith.constant 0 : i32
    return %arg0, %c0_i32 : i32, i32
  }
}

module attributes {stable_mosaic.version = 11 : i64} {
  func.func @_attn_kernel(%arg0: i32, %arg1: memref<16x1xf32, #tpu.memory_space<vmem>>, %arg2: memref<1x16xf32, #tpu.memory_space<vmem>>, %arg3: memref<16x512xbf16, #tpu.memory_space<vmem>>, %arg4: memref<16x16xbf16, #tpu.memory_space<vmem>>, %arg5: memref<1x512xf32, #tpu.memory_space<vmem>>, %arg6: memref<1xf32, #tpu.memory_space<smem>>, %arg7: memref<16x512xf32, #tpu.memory_space<vmem>>) attributes {dimension_semantics = [#tpu.dimension_semantics<parallel>], iteration_bounds = array<i64: 1>, scalar_prefetch = 0 : i64, scratch_operands = 0 : i64, tpu.core_type = #tpu.core_type<tc>, window_params = [{transform_indices = @transform_0, window_bounds = array<i64: 16, 1>}, {pipeline_mode = #tpu.pipeline_mode<synchronous>, transform_indices = @transform_1, window_bounds = array<i64: 1, 16>}, {pipeline_mode = #tpu.pipeline_mode<synchronous>, transform_indices = @transform_2, window_bounds = array<i64: 16, 512>}, {transform_indices = @transform_3, window_bounds = array<i64: 16, 16>}, {pipeline_mode = #tpu.pipeline_mode<synchronous>, transform_indices = @transform_4, window_bounds = array<i64: 1, 512>}, {transform_indices = @transform_5, window_bounds = array<i64: 1>}, {transform_indices = @transform_6, window_bounds = array<i64: 16, 512>}]} {
    %c0 = arith.constant 0 : index
    %c0_0 = arith.constant 0 : index
    %0 = vector.load %arg4[%c0, %c0_0] : memref<16x16xbf16, #tpu.memory_space<vmem>>, vector<16x16xbf16>
    %1 = arith.extf %0 : vector<16x16xbf16> to vector<16x16xf32>
    %c16_i32 = arith.constant 16 : i32
    %2 = arith.muli %arg0, %c16_i32 : i32
    %3 = tpu.iota {dimensions = array<i32: 0>} : vector<16x16xi32>
    %4 = vector.broadcast %2 : i32 to vector<16x16xi32>
    %5 = arith.addi %4, %3 : vector<16x16xi32>
    %6 = tpu.iota {dimensions = array<i32: 1>} : vector<16x16xi32>
    %cst = arith.constant 0.000000e+00 : f32
    %7 = vector.broadcast %cst : f32 to vector<16x16xf32>
    %8 = arith.cmpf one, %1, %7 : vector<16x16xf32>
    %9 = arith.cmpi eq, %5, %6 : vector<16x16xi32>
    %10 = arith.ori %8, %9 : vector<16x16xi1>
    %cst_1 = arith.constant 0.000000e+00 : f32
    %cst_2 = arith.constant -1.000000e+30 : f32
    %11 = vector.broadcast %cst_1 : f32 to vector<16x16xf32>
    %12 = vector.broadcast %cst_2 : f32 to vector<16x16xf32>
    %13 = arith.select %10, %11, %12 : vector<16x16xi1>, vector<16x16xf32>
    %c0_3 = arith.constant 0 : index
    %c0_4 = arith.constant 0 : index
    %14 = vector.load %arg1[%c0_3, %c0_4] : memref<16x1xf32, #tpu.memory_space<vmem>>, vector<16x1xf32>
    %c0_5 = arith.constant 0 : index
    %c0_6 = arith.constant 0 : index
    %15 = vector.load %arg2[%c0_5, %c0_6] : memref<1x16xf32, #tpu.memory_space<vmem>>, vector<1x16xf32>
    %16 = vector.broadcast %14 : vector<16x1xf32> to vector<16x16xf32>
    %17 = vector.broadcast %15 : vector<1x16xf32> to vector<16x16xf32>
    %18 = arith.addf %16, %17 : vector<16x16xf32>
    %c0_7 = arith.constant 0 : index
    %19 = memref.load %arg6[%c0_7] : memref<1xf32, #tpu.memory_space<smem>>
    %20 = vector.broadcast %19 : f32 to vector<16x16xf32>
    %21 = arith.mulf %20, %1 : vector<16x16xf32>
    %22 = arith.addf %18, %21 : vector<16x16xf32>
    %cst_8 = arith.constant 0.000000e+00 : f32
    %23 = vector.broadcast %cst_8 : f32 to vector<16x16xf32>
    %24 = arith.cmpf ogt, %22, %23 : vector<16x16xf32>
    %cst_9 = arith.constant 2.000000e-01 : f32
    %25 = vector.broadcast %cst_9 : f32 to vector<16x16xf32>
    %26 = arith.mulf %25, %22 : vector<16x16xf32>
    %27 = arith.select %24, %22, %26 : vector<16x16xi1>, vector<16x16xf32>
    %28 = arith.addf %27, %13 : vector<16x16xf32>
    %cst_10 = arith.constant dense<0xFF800000> : vector<16xf32>
    %29 = vector.multi_reduction <maximumf>, %28, %cst_10 [1] : vector<16x16xf32> to vector<16xf32>
    %30 = vector.shape_cast %29 : vector<16xf32> to vector<16x1xf32>
    %31 = vector.broadcast %30 : vector<16x1xf32> to vector<16x16xf32>
    %32 = arith.subf %28, %31 : vector<16x16xf32>
    %33 = math.exp %32 : vector<16x16xf32>
    %cst_11 = arith.constant dense<0.000000e+00> : vector<16xf32>
    %34 = vector.multi_reduction <add>, %33, %cst_11 [1] : vector<16x16xf32> to vector<16xf32>
    %35 = vector.shape_cast %34 : vector<16xf32> to vector<16x1xf32>
    %36 = tpu.reciprocal %35 {approx = true} : vector<16x1xf32> -> vector<16x1xf32>
    %37 = vector.broadcast %36 : vector<16x1xf32> to vector<16x16xf32>
    %38 = arith.mulf %33, %37 : vector<16x16xf32>
    %39 = arith.truncf %38 : vector<16x16xf32> to vector<16x16xbf16>
    %c0_12 = arith.constant 0 : index
    %c0_13 = arith.constant 0 : index
    %40 = vector.load %arg3[%c0_12, %c0_13] : memref<16x512xbf16, #tpu.memory_space<vmem>>, vector<16x512xbf16>
    %cst_14 = arith.constant dense<0.000000e+00> : vector<16x512xf32>
    %41 = tpu.matmul %39, %40, %cst_14 {dimension_numbers = #tpu.dot_dimension_numbers<[1], [0], [0], [1], [0, 0, 1, 1], [], []>} : vector<16x16xbf16>, vector<16x512xbf16>, vector<16x512xf32> -> vector<16x512xf32>
    %c0_15 = arith.constant 0 : index
    %c0_16 = arith.constant 0 : index
    %42 = vector.load %arg5[%c0_15, %c0_16] : memref<1x512xf32, #tpu.memory_space<vmem>>, vector<1x512xf32>
    %43 = vector.broadcast %42 : vector<1x512xf32> to vector<16x512xf32>
    %44 = arith.addf %41, %43 : vector<16x512xf32>
    %c0_17 = arith.constant 0 : index
    %c0_18 = arith.constant 0 : index
    %45 = vector.load %arg7[%c0_17, %c0_18] : memref<16x512xf32, #tpu.memory_space<vmem>>, vector<16x512xf32>
    tpu.vector_store %arg7[%c0_17, %c0_18], %44 {strides = array<i32>} : memref<16x512xf32, #tpu.memory_space<vmem>>, vector<16x512xf32>,
    return
  }
  func.func @transform_0(%arg0: i32) -> (i32, i32) {
    %c0_i32 = arith.constant 0 : i32
    %c0_i32_0 = arith.constant 0 : i32
    return %arg0, %c0_i32 : i32, i32
  }
  func.func @transform_1(%arg0: i32) -> (i32, i32) {
    %c0_i32 = arith.constant 0 : i32
    %c0_i32_0 = arith.constant 0 : i32
    %c0_i32_1 = arith.constant 0 : i32
    return %c0_i32, %c0_i32_0 : i32, i32
  }
  func.func @transform_2(%arg0: i32) -> (i32, i32) {
    %c0_i32 = arith.constant 0 : i32
    %c0_i32_0 = arith.constant 0 : i32
    %c0_i32_1 = arith.constant 0 : i32
    return %c0_i32, %c0_i32_0 : i32, i32
  }
  func.func @transform_3(%arg0: i32) -> (i32, i32) {
    %c0_i32 = arith.constant 0 : i32
    %c0_i32_0 = arith.constant 0 : i32
    return %arg0, %c0_i32 : i32, i32
  }
  func.func @transform_4(%arg0: i32) -> (i32, i32) {
    %c0_i32 = arith.constant 0 : i32
    %c0_i32_0 = arith.constant 0 : i32
    %c0_i32_1 = arith.constant 0 : i32
    return %c0_i32, %c0_i32_0 : i32, i32
  }
  func.func @transform_5(%arg0: i32) -> i32 {
    %c0_i32 = arith.constant 0 : i32
    %c0_i32_0 = arith.constant 0 : i32
    return %c0_i32 : i32
  }
  func.func @transform_6(%arg0: i32) -> (i32, i32) {
    %c0_i32 = arith.constant 0 : i32
    %c0_i32_0 = arith.constant 0 : i32
    return %arg0, %c0_i32 : i32, i32
  }
}

</mosaic_0001>

<llo_original>
// kernel: gat_model.4
$region0: #{gat_model.4}
  #allocation0 [shape = 'u32[]', space=smem, size = 0x4, offset = 0x4, fixed_abs, tag = 'smem constant byte address 0x4 - core index']
  #allocation1 [shape = 'u32[72,128]{1,0:T(1,128)}', space=vmem, size = 0x9000, scoped, tag = 'internal scratch']
  %s0 = inlined_call_operand.vmem [shape: bf16[16,8], index: 0, kind: input, shape index: {}]
  %s1 = inlined_call_operand.vmem [shape: bf16[8,128], index: 1, kind: input, shape index: {}]
  %s2 = inlined_call_operand.vmem [shape: f32[1,128], index: 2, kind: input, shape index: {}]
  %s3 = inlined_call_operand.vmem [shape: f32[1,128], index: 3, kind: input, shape index: {}]
  %s4 = inlined_call_operand.vmem [shape: bf16[16,128], index: 4, kind: output, shape index: {0}]
  %s5 = inlined_call_operand.vmem [shape: f32[16,1], index: 5, kind: output, shape index: {1}]
  %s6 = inlined_call_operand.vmem [shape: f32[16,1], index: 6, kind: output, shape index: {2}]
  %7 = xla_tuple %s4, %s5, %s6
  %s8 = sld [smem:[#allocation0]]
  $region42: #{gat_model.4} parent=0
    _
  %s10 = ssub.s32 1, %s8
  %s11 = scalar_select 0, %s10, %s8
  // Predicated region
  $region2: #{gat_model.4} parent=0 // pred_check
    _
  $region3: #{gat_model.4} parent=0 // pred_check_branch
    %13 = sbr.rel (0) target = $region5
  $region4: #{gat_model.4} parent=0 // pred_region
    _
  $region5: #{gat_model.4} parent=0 // pred_fallthru
    _
  // Predicated region
  $region6: #{gat_model.4} parent=0 // pred_check
    _
  $region7: #{gat_model.4} parent=0 // pred_check_branch
    %15 = sbr.rel (0) target = $region9
  $region8: #{gat_model.4} parent=0 // pred_region
    _
  $region9: #{gat_model.4} parent=0 // pred_fallthru
    _
  // Predicated region
  $region10: #{gat_model.4} parent=0 // pred_check
    _
  $region11: #{gat_model.4} parent=0 // pred_check_branch
    %17 = sbr.rel (0) target = $region13
  $region12: #{gat_model.4} parent=0 // pred_region
    _
  $region13: #{gat_model.4} parent=0 // pred_fallthru
    _
  // Predicated region
  $region14: #{gat_model.4} parent=0 // pred_check
    _
  $region15: #{gat_model.4} parent=0 // pred_check_branch
    %19 = sbr.rel (0) target = $region17
  $region16: #{gat_model.4} parent=0 // pred_region
    _
  $region17: #{gat_model.4} parent=0 // pred_fallthru
    _
  %v21 = vld [vmem:[%s0] sm:$0xf]
  %v22 = vld [vmem:[%s0 + $0x4] sm:$0xf]
  %v23 = vld [vmem:[%s1] sm:$0xf]
  %v26 = vunpack.c.l.b16 %v21
  %v27 = vunpack.c.l.b16 %v22
  %v28 = vpack.c.b16 %v27, %v26
  %vm29 = vcmask 64512
  %v31 = vsel %vm29, %v28, 0
  %vm33 = vcmask 1043456
  %v35 = vsel %vm33, %v23, 0
  %37 = vmatpush.bf16.msra.mxu0 0
  %38 = vmatpush.bf16.msra.mxu0 0
  %39 = vmatpush.bf16.msra.mxu0 0
  %40 = vmatpush.bf16.msra.mxu0 0
  %41 = vmatpush.bf16.msra.mxu0 0
  %42 = vmatpush.bf16.msra.mxu0 0
  %43 = vmatpush.bf16.msra.mxu0 0
  %44 = vmatpush.bf16.msra.mxu0 %v35
  %45 = vmatmul.bf16.gmra.mxu0 %v31
  %v46 = vpop.f32.mrf.mxu0
  %v47 = vadd.f32 0.0, %v46
  %v48 = vpop.f32.mrf.mxu0
  %v49 = vadd.f32 0.0, %v48
  %50 = vdwg.mxu0
  %v51 = vld [vmem:[%s2] sm:$0x1]
  %v53 = vperm.slane %v51, 0
  %v55 = vmul.f32 %v47, %v53
  %v56 = vmul.f32 %v49, %v53
  %57 = vadd.xlane.f32.xlu0 %v55
  %v58 = vpop.xlane.xlu0 %57
  %59 = vadd.xlane.f32.xlu0 %v56
  %v60 = vpop.xlane.xlu0 %59
  %vm61 = vcmask 7168
  %62 = vst.msk [vmem:[%s5] sm:$0xff] %vm61, %v58
  %63 = vst.msk [vmem:[%s5 + $0x8] sm:$0xff] %vm61, %v60
  %v64 = vld [vmem:[%s3] sm:$0x1]
  %v66 = vperm.slane %v64, 0
  %v68 = vmul.f32 %v47, %v66
  %v69 = vmul.f32 %v49, %v66
  %70 = vadd.xlane.f32.xlu0 %v68
  %v71 = vpop.xlane.xlu0 %70
  %72 = vadd.xlane.f32.xlu0 %v69
  %v73 = vpop.xlane.xlu0 %72
  %74 = vst.msk [vmem:[%s6] sm:$0xff] %vm61, %v71
  %75 = vst.msk [vmem:[%s6 + $0x8] sm:$0xff] %vm61, %v73
  %v76 = vpack.c.bf16 %v47, %v47
  %v77 = vpack.c.bf16 %v49, %v49
  %78 = vst [vmem:[%s4] sm:$0xf] %v76
  %79 = vst [vmem:[%s4 + $0x4] sm:$0xf] %v77
  // Predicated region
  $region18: #{gat_model.4} parent=0 // pred_check
    _
  $region19: #{gat_model.4} parent=0 // pred_check_branch
    %81 = sbr.rel (0) target = $region21
  $region20: #{gat_model.4} parent=0 // pred_region
    _
  $region21: #{gat_model.4} parent=0 // pred_fallthru
    _
  // Predicated region
  $region22: #{gat_model.4} parent=0 // pred_check
    _
  $region23: #{gat_model.4} parent=0 // pred_check_branch
    %83 = sbr.rel (0) target = $region25
  $region24: #{gat_model.4} parent=0 // pred_region
    _
  $region25: #{gat_model.4} parent=0 // pred_fallthru
    _
  // Predicated region
  $region26: #{gat_model.4} parent=0 // pred_check
    _
  $region27: #{gat_model.4} parent=0 // pred_check_branch
    %85 = sbr.rel (0) target = $region29
  $region28: #{gat_model.4} parent=0 // pred_region
    _
  $region29: #{gat_model.4} parent=0 // pred_fallthru
    _
  // Predicated region
  $region30: #{gat_model.4} parent=0 // pred_check
    _
  $region31: #{gat_model.4} parent=0 // pred_check_branch
    %87 = sbr.rel (0) target = $region33
  $region32: #{gat_model.4} parent=0 // pred_region
    _
  $region33: #{gat_model.4} parent=0 // pred_fallthru
    _
  // Predicated region
  $region34: #{gat_model.4} parent=0 // pred_check
    _
  $region35: #{gat_model.4} parent=0 // pred_check_branch
    %89 = sbr.rel (0) target = $region37
  $region36: #{gat_model.4} parent=0 // pred_region
    _
  $region37: #{gat_model.4} parent=0 // pred_fallthru
    _
  // Predicated region
  $region38: #{gat_model.4} parent=0 // pred_check
    _
  $region39: #{gat_model.4} parent=0 // pred_check_branch
    %91 = sbr.rel (0) target = $region41
  $region40: #{gat_model.4} parent=0 // pred_region
    _
  $region41: #{gat_model.4} parent=0 // pred_fallthru
    _

// kernel: gat_model.5
$region0: #{gat_model.5}
  #allocation0 [shape = 'u32[]', space=smem, size = 0x4, offset = 0x4, fixed_abs, tag = 'smem constant byte address 0x4 - core index']
  #allocation1 [shape = 'u32[72,128]{1,0:T(1,128)}', space=vmem, size = 0x9000, scoped, tag = 'internal scratch']
  #allocation2 [shape = 'f32[1]{0:T(128)S(6)}', space=smem, size = 0x200, scoped, tag = 'scoped memory for gat_model.5']
  %s0 = inlined_call_operand.vmem [shape: f32[16,1], index: 0, kind: input, shape index: {}]
  %s1 = inlined_call_operand.vmem [shape: f32[1,16], index: 1, kind: input, shape index: {}]
  %s2 = inlined_call_operand.vmem [shape: bf16[16,128], index: 2, kind: input, shape index: {}]
  %s3 = inlined_call_operand.vmem [shape: bf16[16,16], index: 3, kind: input, shape index: {}]
  %s4 = inlined_call_operand.vmem [shape: f32[1,128], index: 4, kind: input, shape index: {}]
  %s5 = inlined_call_operand.<no memory space> [shape: f32[1], index: 5, kind: input, shape index: {}]
  %s6 = inlined_call_operand.vmem [shape: bf16[16,128], index: 6, kind: output, shape index: {}]
  %s7 = sld [smem:[#allocation0]]
  $region34: #{gat_model.5} parent=0
    _
  %s9 = ssub.s32 1, %s7
  %s10 = scalar_select 0, %s9, %s7
  %11 = sst [smem:[#allocation2]] %s5
  // Predicated region
  $region2: #{gat_model.5} parent=0 // pred_check
    _
  $region3: #{gat_model.5} parent=0 // pred_check_branch
    %13 = sbr.rel (0) target = $region5
  $region4: #{gat_model.5} parent=0 // pred_region
    _
  $region5: #{gat_model.5} parent=0 // pred_fallthru
    _
  // Predicated region
  $region6: #{gat_model.5} parent=0 // pred_check
    _
  $region7: #{gat_model.5} parent=0 // pred_check_branch
    %15 = sbr.rel (0) target = $region9
  $region8: #{gat_model.5} parent=0 // pred_region
    _
  $region9: #{gat_model.5} parent=0 // pred_fallthru
    _
  // Predicated region
  $region10: #{gat_model.5} parent=0 // pred_check
    _
  $region11: #{gat_model.5} parent=0 // pred_check_branch
    %17 = sbr.rel (0) target = $region13
  $region12: #{gat_model.5} parent=0 // pred_region
    _
  $region13: #{gat_model.5} parent=0 // pred_fallthru
    _
  // Predicated region
  $region14: #{gat_model.5} parent=0 // pred_check
    _
  $region15: #{gat_model.5} parent=0 // pred_check_branch
    %19 = sbr.rel (0) target = $region17
  $region16: #{gat_model.5} parent=0 // pred_region
    _
  $region17: #{gat_model.5} parent=0 // pred_fallthru
    _
  // Predicated region
  $region18: #{gat_model.5} parent=0 // pred_check
    _
  $region19: #{gat_model.5} parent=0 // pred_check_branch
    %21 = sbr.rel (0) target = $region21
  $region20: #{gat_model.5} parent=0 // pred_region
    _
  $region21: #{gat_model.5} parent=0 // pred_fallthru
    _
  // Predicated region
  $region22: #{gat_model.5} parent=0 // pred_check
    _
  $region23: #{gat_model.5} parent=0 // pred_check_branch
    %23 = sbr.rel (0) target = $region25
  $region24: #{gat_model.5} parent=0 // pred_region
    _
  $region25: #{gat_model.5} parent=0 // pred_fallthru
    _
  %v25 = vld [vmem:[%s3] sm:$0xf]
  %v26 = vld [vmem:[%s3 + $0x4] sm:$0xf]
  %v27 = vunpack.c.l.bf16 %v25
  %v28 = vunpack.c.l.bf16 %v26
  %s29 = smul.u32 0, 16
  %v30 = vlaneseq
  %v31 = vshrl.u32 %v30, 7
  %v32 = vadd.s32 %v31, 8
  %v33 = vstv %s29
  %v34 = vadd.s32 %v33, %v31
  %v35 = vadd.s32 %v33, %v32
  %v36 = vlaneseq
  %v37 = vand.u32 %v36, 127
  %vm38 = vcmp.ne.f32.partialorder %v27, 0.0
  %vm39 = vcmp.ne.f32.partialorder %v28, 0.0
  %vm40 = vcmp.eq.s32.totalorder %v34, %v37
  %vm41 = vcmp.eq.s32.totalorder %v35, %v37
  %vm42 = vmor %vm38, %vm40
  %vm43 = vmor %vm39, %vm41
  %v44 = vsel %vm42, 0.0, -1e+30
  %v45 = vsel %vm43, 0.0, -1e+30
  %v46 = vld [vmem:[%s0] sm:$0xff]
  %v47 = vld [vmem:[%s0 + $0x8] sm:$0xff]
  %v48 = vld [vmem:[%s1] sm:$0x1]
  %50 = vset.pattern.permute.xlu0 0
  %51 = vperm.xlu0 %50, %v46
  %v52 = vpop.permute.xlu0 %51
  %55 = vset.pattern.permute.xlu0 0
  %56 = vperm.xlu0 %55, %v47
  %v57 = vpop.permute.xlu0 %56
  %v60 = vperm.slane %v48, 0
  %v62 = vadd.f32 %v52, %v60
  %v63 = vadd.f32 %v57, %v60
  %s64 = sld [smem:[#allocation2]]
  %v65 = vstv %s64
  %v66 = vmul.f32 %v65, %v27
  %v67 = vmul.f32 %v65, %v28
  %v68 = vadd.f32 %v62, %v66
  %v69 = vadd.f32 %v63, %v67
  %vm70 = vcmp.gt.f32.partialorder %v68, 0.0
  %vm71 = vcmp.gt.f32.partialorder %v69, 0.0
  %v72 = vmul.f32 %v68, 0.2
  %v73 = vmul.f32 %v69, 0.2
  %v74 = vsel %vm70, %v68, %v72
  %v75 = vsel %vm71, %v69, %v73
  %v76 = vadd.f32 %v74, %v44
  %v77 = vadd.f32 %v75, %v45
  %vm78 = vcmask 130048
  %v79 = vsel %vm78, %v76, -inf
  %80 = vmax.xlane.f32.xlu0 %v79
  %v81 = vpop.xlane.xlu0 %80
  %v82 = vsel %vm78, %v77, -inf
  %83 = vmax.xlane.f32.xlu0 %v82
  %v84 = vpop.xlane.xlu0 %83
  %v85 = vsub.f32 %v76, %v81
  %v86 = vsub.f32 %v77, %v84
  %v87 = vmul.f32 %v85, 1.442695
  %v88 = vpow.pop %v87
  %v89 = vmul.f32 %v86, 1.442695
  %v90 = vpow.pop %v89
  %v91 = vsel %vm78, %v88, 0.0
  %92 = vadd.xlane.f32.xlu0 %v91
  %v93 = vpop.xlane.xlu0 %92
  %v94 = vsel %vm78, %v90, 0.0
  %95 = vadd.xlane.f32.xlu0 %v94
  %v96 = vpop.xlane.xlu0 %95
  %v97 = vrcp.pop %v93
  %v98 = vrcp.pop %v96
  %v99 = vmul.f32 %v88, %v97
  %v100 = vmul.f32 %v90, %v98
  %v101 = vpack.c.bf16 %v100, %v99
  %v102 = vld [vmem:[%s2] sm:$0xf]
  %v103 = vld [vmem:[%s2 + $0x4] sm:$0xf]
  %v104 = vld [vmem:[%s4] sm:$0x1]
  %v106 = vperm.slane %v104, 0
  %v110 = vunpack.c.l.b16 %v102
  %v111 = vunpack.c.l.b16 %v103
  %v112 = vpack.c.b16 %v111, %v110
  %v115 = vsel %vm78, %v101, 0
  %117 = vmatpush.bf16.msra.mxu0 0
  %118 = vmatpush.bf16.msra.mxu0 0
  %119 = vmatpush.bf16.msra.mxu0 0
  %120 = vmatpush.bf16.msra.mxu0 0
  %121 = vmatpush.bf16.msra.mxu0 0
  %122 = vmatpush.bf16.msra.mxu0 0
  %123 = vmatpush.bf16.msra.mxu0 0
  %124 = vmatpush.bf16.msra.mxu0 %v112
  %125 = vmatmul.bf16.gmra.mxu0 %v115
  %v126 = vpop.f32.mrf.mxu0
  %v127 = vadd.f32 %v106, %v126
  %v128 = vpop.f32.mrf.mxu0
  %v129 = vadd.f32 %v106, %v128
  %130 = vdwg.mxu0
  %v131 = vmax.f32 %v127, 0.0
  %v132 = vmax.f32 %v129, 0.0
  %v133 = vpack.c.bf16 %v131, %v131
  %v134 = vpack.c.bf16 %v132, %v132
  %135 = vst [vmem:[%s6] sm:$0xf] %v133
  %136 = vst [vmem:[%s6 + $0x4] sm:$0xf] %v134
  // Predicated region
  $region26: #{gat_model.5} parent=0 // pred_check
    _
  $region27: #{gat_model.5} parent=0 // pred_check_branch
    %138 = sbr.rel (0) target = $region29
  $region28: #{gat_model.5} parent=0 // pred_region
    _
  $region29: #{gat_model.5} parent=0 // pred_fallthru
    _
  // Predicated region
  $region30: #{gat_model.5} parent=0 // pred_check
    _
  $region31: #{gat_model.5} parent=0 // pred_check_branch
    %140 = sbr.rel (0) target = $region33
  $region32: #{gat_model.5} parent=0 // pred_region
    _
  $region33: #{gat_model.5} parent=0 // pred_fallthru
    _

// kernel: gat_model.7
$region0: #{gat_model.7}
  #allocation0 [shape = 'u32[]', space=smem, size = 0x4, offset = 0x4, fixed_abs, tag = 'smem constant byte address 0x4 - core index']
  #allocation1 [shape = 'u32[72,128]{1,0:T(1,128)}', space=vmem, size = 0x9000, scoped, tag = 'internal scratch']
  #allocation2 [shape = 'f32[1]{0:T(128)S(6)}', space=smem, size = 0x200, scoped, tag = 'scoped memory for gat_model.7']
  %s0 = inlined_call_operand.vmem [shape: f32[16,1], index: 0, kind: input, shape index: {}]
  %s1 = inlined_call_operand.vmem [shape: f32[1,16], index: 1, kind: input, shape index: {}]
  %s2 = inlined_call_operand.vmem [shape: bf16[16,512], index: 2, kind: input, shape index: {}]
  %s3 = inlined_call_operand.vmem [shape: bf16[16,16], index: 3, kind: input, shape index: {}]
  %s4 = inlined_call_operand.vmem [shape: f32[1,512], index: 4, kind: input, shape index: {}]
  %s5 = inlined_call_operand.<no memory space> [shape: f32[1], index: 5, kind: input, shape index: {}]
  %s6 = inlined_call_operand.hbm [shape: f32[16,512], index: 6, kind: output, shape index: {}]
  %s7 = sld [smem:[#allocation0]]
  $region34: #{gat_model.7} parent=0
    _
  %s9 = ssub.s32 1, %s7
  %s10 = scalar_select 0, %s9, %s7
  %11 = sst [smem:[#allocation2]] %s5
  $region1: #{gat_model.7} parent=0
    #allocation3 [shape = 'u8[32768]{0}', space=vmem, size = 0x8000, scoped, tag = 'output window, operand 0, single buffered']
    #allocation4 [shape = 's32[1]{0}', space=sflag, size = 0x4, scoped, tag = 'scoped memory for gat_model.7']
    %12 = vsyncpa [#allocation4], 0
    // Predicated region
    $region2: #{gat_model.7} parent=1 // pred_check
      _
    $region3: #{gat_model.7} parent=1 // pred_check_branch
      %14 = sbr.rel (0) target = $region5
    $region4: #{gat_model.7} parent=1 // pred_region
      _
    $region5: #{gat_model.7} parent=1 // pred_fallthru
      _
    // Predicated region
    $region6: #{gat_model.7} parent=1 // pred_check
      _
    $region7: #{gat_model.7} parent=1 // pred_check_branch
      %16 = sbr.rel (0) target = $region9
    $region8: #{gat_model.7} parent=1 // pred_region
      _
    $region9: #{gat_model.7} parent=1 // pred_fallthru
      _
    // Predicated region
    $region10: #{gat_model.7} parent=1 // pred_check
      _
    $region11: #{gat_model.7} parent=1 // pred_check_branch
      %18 = sbr.rel (0) target = $region13
    $region12: #{gat_model.7} parent=1 // pred_region
      _
    $region13: #{gat_model.7} parent=1 // pred_fallthru
      _
    // Predicated region
    $region14: #{gat_model.7} parent=1 // pred_check
      _
    $region15: #{gat_model.7} parent=1 // pred_check_branch
      %20 = sbr.rel (0) target = $region17
    $region16: #{gat_model.7} parent=1 // pred_region
      _
    $region17: #{gat_model.7} parent=1 // pred_fallthru
      _
    // Predicated region
    $region18: #{gat_model.7} parent=1 // pred_check
      _
    $region19: #{gat_model.7} parent=1 // pred_check_branch
      %22 = sbr.rel (0) target = $region21
    $region20: #{gat_model.7} parent=1 // pred_region
      _
    $region21: #{gat_model.7} parent=1 // pred_fallthru
      _
    // Predicated region
    $region22: #{gat_model.7} parent=1 // pred_check
      _
    $region23: #{gat_model.7} parent=1 // pred_check_branch
      %24 = sbr.rel (0) target = $region25
    $region24: #{gat_model.7} parent=1 // pred_region
      _
    $region25: #{gat_model.7} parent=1 // pred_fallthru
      _
    %v26 = vld [vmem:[%s3] sm:$0xf]
    %v27 = vld [vmem:[%s3 + $0x4] sm:$0xf]
    %v28 = vunpack.c.l.bf16 %v26
    %v29 = vunpack.c.l.bf16 %v27
    %s30 = smul.u32 0, 16
    %v31 = vlaneseq
    %v32 = vshrl.u32 %v31, 7
    %v33 = vadd.s32 %v32, 8
    %v34 = vstv %s30
    %v35 = vadd.s32 %v34, %v32
    %v36 = vadd.s32 %v34, %v33
    %v37 = vlaneseq
    %v38 = vand.u32 %v37, 127
    %vm39 = vcmp.ne.f32.partialorder %v28, 0.0
    %vm40 = vcmp.ne.f32.partialorder %v29, 0.0
    %vm41 = vcmp.eq.s32.totalorder %v35, %v38
    %vm42 = vcmp.eq.s32.totalorder %v36, %v38
    %vm43 = vmor %vm39, %vm41
    %vm44 = vmor %vm40, %vm42
    %v45 = vsel %vm43, 0.0, -1e+30
    %v46 = vsel %vm44, 0.0, -1e+30
    %v47 = vld [vmem:[%s0] sm:$0xff]
    %v48 = vld [vmem:[%s0 + $0x8] sm:$0xff]
    %v49 = vld [vmem:[%s1] sm:$0x1]
    %51 = vset.pattern.permute.xlu0 0
    %52 = vperm.xlu0 %51, %v47
    %v53 = vpop.permute.xlu0 %52
    %56 = vset.pattern.permute.xlu0 0
    %57 = vperm.xlu0 %56, %v48
    %v58 = vpop.permute.xlu0 %57
    %v61 = vperm.slane %v49, 0
    %v63 = vadd.f32 %v53, %v61
    %v64 = vadd.f32 %v58, %v61
    %s65 = sld [smem:[#allocation2]]
    %v66 = vstv %s65
    %v67 = vmul.f32 %v66, %v28
    %v68 = vmul.f32 %v66, %v29
    %v69 = vadd.f32 %v63, %v67
    %v70 = vadd.f32 %v64, %v68
    %vm71 = vcmp.gt.f32.partialorder %v69, 0.0
    %vm72 = vcmp.gt.f32.partialorder %v70, 0.0
    %v73 = vmul.f32 %v69, 0.2
    %v74 = vmul.f32 %v70, 0.2
    %v75 = vsel %vm71, %v69, %v73
    %v76 = vsel %vm72, %v70, %v74
    %v77 = vadd.f32 %v75, %v45
    %v78 = vadd.f32 %v76, %v46
    %vm79 = vcmask 130048
    %v80 = vsel %vm79, %v77, -inf
    %81 = vmax.xlane.f32.xlu0 %v80
    %v82 = vpop.xlane.xlu0 %81
    %v83 = vsel %vm79, %v78, -inf
    %84 = vmax.xlane.f32.xlu0 %v83
    %v85 = vpop.xlane.xlu0 %84
    %v86 = vsub.f32 %v77, %v82
    %v87 = vsub.f32 %v78, %v85
    %v88 = vmul.f32 %v86, 1.442695
    %v89 = vpow.pop %v88
    %v90 = vmul.f32 %v87, 1.442695
    %v91 = vpow.pop %v90
    %v92 = vsel %vm79, %v89, 0.0
    %93 = vadd.xlane.f32.xlu0 %v92
    %v94 = vpop.xlane.xlu0 %93
    %v95 = vsel %vm79, %v91, 0.0
    %96 = vadd.xlane.f32.xlu0 %v95
    %v97 = vpop.xlane.xlu0 %96
    %v98 = vrcp.pop %v94
    %v99 = vrcp.pop %v97
    %v100 = vmul.f32 %v89, %v98
    %v101 = vmul.f32 %v91, %v99
    %v102 = vpack.c.bf16 %v101, %v100
    %v103 = vld [vmem:[%s2] sm:$0xff]
    %v104 = vld [vmem:[%s2 + $0x8] sm:$0xff]
    %v105 = vld [vmem:[%s2 + $0x10] sm:$0xff]
    %v106 = vld [vmem:[%s2 + $0x18] sm:$0xff]
    %v107 = vld [vmem:[%s4] sm:$0xf]
    %v109 = vperm.slane %v107, 0
    %v110 = vperm.slane %v107, 1
    %v111 = vperm.slane %v107, 2
    %v112 = vperm.slane %v107, 3
    %v121 = vunpack.c.l.b16 %v103
    %v122 = vunpack.c.h.b16 %v103
    %v123 = vunpack.c.l.b16 %v104
    %v124 = vunpack.c.h.b16 %v104
    %v125 = vunpack.c.l.b16 %v105
    %v126 = vunpack.c.h.b16 %v105
    %v127 = vunpack.c.l.b16 %v106
    %v128 = vunpack.c.h.b16 %v106
    %v129 = vpack.c.b16 %v125, %v121
    %v130 = vpack.c.b16 %v126, %v122
    %v131 = vpack.c.b16 %v127, %v123
    %v132 = vpack.c.b16 %v128, %v124
    %v138 = vsel %vm79, %v102, 0
    %140 = vmatpush.bf16.msra.mxu0 0
    %141 = vmatpush.bf16.msra.mxu0 0
    %142 = vmatpush.bf16.msra.mxu0 0
    %143 = vmatpush.bf16.msra.mxu0 0
    %144 = vmatpush.bf16.msra.mxu0 0
    %145 = vmatpush.bf16.msra.mxu0 0
    %146 = vmatpush.bf16.msra.mxu0 0
    %147 = vmatpush.bf16.msra.mxu0 %v129
    %148 = vmatmul.bf16.gmra.mxu0 %v138
    %v149 = vpop.f32.mrf.mxu0
    %v150 = vadd.f32 %v109, %v149
    %v151 = vpop.f32.mrf.mxu0
    %v152 = vadd.f32 %v109, %v151
    %153 = vdwg.mxu0
    %154 = vmatpush.bf16.msra.mxu0 0
    %155 = vmatpush.bf16.msra.mxu0 0
    %156 = vmatpush.bf16.msra.mxu0 0
    %157 = vmatpush.bf16.msra.mxu0 0
    %158 = vmatpush.bf16.msra.mxu0 0
    %159 = vmatpush.bf16.msra.mxu0 0
    %160 = vmatpush.bf16.msra.mxu0 0
    %161 = vmatpush.bf16.msra.mxu0 %v130
    %162 = vmatmul.bf16.gmra.mxu0 %v138
    %v163 = vpop.f32.mrf.mxu0
    %v164 = vadd.f32 %v110, %v163
    %v165 = vpop.f32.mrf.mxu0
    %v166 = vadd.f32 %v110, %v165
    %167 = vdwg.mxu0
    %168 = vmatpush.bf16.msra.mxu0 0
    %169 = vmatpush.bf16.msra.mxu0 0
    %170 = vmatpush.bf16.msra.mxu0 0
    %171 = vmatpush.bf16.msra.mxu0 0
    %172 = vmatpush.bf16.msra.mxu0 0
    %173 = vmatpush.bf16.msra.mxu0 0
    %174 = vmatpush.bf16.msra.mxu0 0
    %175 = vmatpush.bf16.msra.mxu0 %v131
    %176 = vmatmul.bf16.gmra.mxu0 %v138
    %v177 = vpop.f32.mrf.mxu0
    %v178 = vadd.f32 %v111, %v177
    %v179 = vpop.f32.mrf.mxu0
    %v180 = vadd.f32 %v111, %v179
    %181 = vdwg.mxu0
    %182 = vmatpush.bf16.msra.mxu0 0
    %183 = vmatpush.bf16.msra.mxu0 0
    %184 = vmatpush.bf16.msra.mxu0 0
    %185 = vmatpush.bf16.msra.mxu0 0
    %186 = vmatpush.bf16.msra.mxu0 0
    %187 = vmatpush.bf16.msra.mxu0 0
    %188 = vmatpush.bf16.msra.mxu0 0
    %189 = vmatpush.bf16.msra.mxu0 %v132
    %190 = vmatmul.bf16.gmra.mxu0 %v138
    %v191 = vpop.f32.mrf.mxu0
    %v192 = vadd.f32 %v112, %v191
    %v193 = vpop.f32.mrf.mxu0
    %v194 = vadd.f32 %v112, %v193
    %195 = vdwg.mxu0
    %196 = vst [vmem:[#allocation3] sm:$0xff] %v150
    %197 = vst [vmem:[#allocation3 + $0x8] sm:$0xff] %v164
    %198 = vst [vmem:[#allocation3 + $0x10] sm:$0xff] %v178
    %199 = vst [vmem:[#allocation3 + $0x18] sm:$0xff] %v192
    %200 = vst [vmem:[#allocation3 + $0x20] sm:$0xff] %v152
    %201 = vst [vmem:[#allocation3 + $0x28] sm:$0xff] %v166
    %202 = vst [vmem:[#allocation3 + $0x30] sm:$0xff] %v180
    %203 = vst [vmem:[#allocation3 + $0x38] sm:$0xff] %v194
    // Predicated region
    $region26: #{gat_model.7} parent=1 // pred_check
      _
    $region27: #{gat_model.7} parent=1 // pred_check_branch
      %205 = sbr.rel (0) target = $region29
    $region28: #{gat_model.7} parent=1 // pred_region
      %207 = vsyncadd [#allocation4], 0
      %s208 = sshll.u32 [#allocation3], 4
      %s209 = int_to_ptr.vmem [resolvable:$true] %s208
      %s210 = sshll.u32 %s6, 4
      %s211 = int_to_ptr.hbm [resolvable:$true] %s210
      %216 = dma.vmem_to_hbm [thread:$0]  %s209, 1024, %s211, [#allocation4], 512, 512, 32
    $region29: #{gat_model.7} parent=1 // pred_fallthru
      _
    // Predicated region
    $region30: #{gat_model.7} parent=1 // pred_check
      _
    $region31: #{gat_model.7} parent=1 // pred_check_branch
      %218 = sbr.rel (0) target = $region33
    $region32: #{gat_model.7} parent=1 // pred_region
      %220 = dma.done [#allocation4], 1024
    $region33: #{gat_model.7} parent=1 // pred_fallthru
      _
    %221 = vsyncpa [#allocation4], 1

// kernel: gat_model.6
$region0: #{gat_model.6}
  #allocation0 [shape = 'u32[]', space=smem, size = 0x4, offset = 0x4, fixed_abs, tag = 'smem constant byte address 0x4 - core index']
  #allocation1 [shape = 'u32[72,128]{1,0:T(1,128)}', space=vmem, size = 0x9000, scoped, tag = 'internal scratch']
  %s0 = inlined_call_operand.vmem [shape: bf16[16,128], index: 0, kind: input, shape index: {}]
  %s1 = inlined_call_operand.vmem [shape: bf16[128,512], index: 1, kind: input, shape index: {}]
  %s2 = inlined_call_operand.vmem [shape: f32[1,512], index: 2, kind: input, shape index: {}]
  %s3 = inlined_call_operand.vmem [shape: f32[1,512], index: 3, kind: input, shape index: {}]
  %s4 = inlined_call_operand.vmem [shape: bf16[16,512], index: 4, kind: output, shape index: {0}]
  %s5 = inlined_call_operand.vmem [shape: f32[16,1], index: 5, kind: output, shape index: {1}]
  %s6 = inlined_call_operand.vmem [shape: f32[16,1], index: 6, kind: output, shape index: {2}]
  %7 = xla_tuple %s4, %s5, %s6
  %s8 = sld [smem:[#allocation0]]
  $region42: #{gat_model.6} parent=0
    _
  %s10 = ssub.s32 1, %s8
  %s11 = scalar_select 0, %s10, %s8
  // Predicated region
  $region2: #{gat_model.6} parent=0 // pred_check
    _
  $region3: #{gat_model.6} parent=0 // pred_check_branch
    %13 = sbr.rel (0) target = $region5
  $region4: #{gat_model.6} parent=0 // pred_region
    _
  $region5: #{gat_model.6} parent=0 // pred_fallthru
    _
  // Predicated region
  $region6: #{gat_model.6} parent=0 // pred_check
    _
  $region7: #{gat_model.6} parent=0 // pred_check_branch
    %15 = sbr.rel (0) target = $region9
  $region8: #{gat_model.6} parent=0 // pred_region
    _
  $region9: #{gat_model.6} parent=0 // pred_fallthru
    _
  // Predicated region
  $region10: #{gat_model.6} parent=0 // pred_check
    _
  $region11: #{gat_model.6} parent=0 // pred_check_branch
    %17 = sbr.rel (0) target = $region13
  $region12: #{gat_model.6} parent=0 // pred_region
    _
  $region13: #{gat_model.6} parent=0 // pred_fallthru
    _
  // Predicated region
  $region14: #{gat_model.6} parent=0 // pred_check
    _
  $region15: #{gat_model.6} parent=0 // pred_check_branch
    %19 = sbr.rel (0) target = $region17
  $region16: #{gat_model.6} parent=0 // pred_region
    _
  $region17: #{gat_model.6} parent=0 // pred_fallthru
    _
  %v20 = vld [vmem:[%s0] sm:$0xf]
  %v21 = vld [vmem:[%s0 + $0x4] sm:$0xf]
  %v22 = vld [vmem:[%s1] sm:$0xff]
  %v23 = vld [vmem:[%s1 + $0x8] sm:$0xff]
  %v24 = vld [vmem:[%s1 + $0x10] sm:$0xff]
  %v25 = vld [vmem:[%s1 + $0x18] sm:$0xff]
  %v26 = vld [vmem:[%s1 + $0x20] sm:$0xff]
  %v27 = vld [vmem:[%s1 + $0x28] sm:$0xff]
  %v28 = vld [vmem:[%s1 + $0x30] sm:$0xff]
  %v29 = vld [vmem:[%s1 + $0x38] sm:$0xff]
  %v30 = vld [vmem:[%s1 + $0x40] sm:$0xff]
  %v31 = vld [vmem:[%s1 + $0x48] sm:$0xff]
  %v32 = vld [vmem:[%s1 + $0x50] sm:$0xff]
  %v33 = vld [vmem:[%s1 + $0x58] sm:$0xff]
  %v34 = vld [vmem:[%s1 + $0x60] sm:$0xff]
  %v35 = vld [vmem:[%s1 + $0x68] sm:$0xff]
  %v36 = vld [vmem:[%s1 + $0x70] sm:$0xff]
  %v37 = vld [vmem:[%s1 + $0x78] sm:$0xff]
  %v38 = vld [vmem:[%s1 + $0x80] sm:$0xff]
  %v39 = vld [vmem:[%s1 + $0x88] sm:$0xff]
  %v40 = vld [vmem:[%s1 + $0x90] sm:$0xff]
  %v41 = vld [vmem:[%s1 + $0x98] sm:$0xff]
  %v42 = vld [vmem:[%s1 + $0xa0] sm:$0xff]
  %v43 = vld [vmem:[%s1 + $0xa8] sm:$0xff]
  %v44 = vld [vmem:[%s1 + $0xb0] sm:$0xff]
  %v45 = vld [vmem:[%s1 + $0xb8] sm:$0xff]
  %v46 = vld [vmem:[%s1 + $0xc0] sm:$0xff]
  %v47 = vld [vmem:[%s1 + $0xc8] sm:$0xff]
  %v48 = vld [vmem:[%s1 + $0xd0] sm:$0xff]
  %v49 = vld [vmem:[%s1 + $0xd8] sm:$0xff]
  %v50 = vld [vmem:[%s1 + $0xe0] sm:$0xff]
  %v51 = vld [vmem:[%s1 + $0xe8] sm:$0xff]
  %v52 = vld [vmem:[%s1 + $0xf0] sm:$0xff]
  %v53 = vld [vmem:[%s1 + $0xf8] sm:$0xff]
  %v56 = vunpack.c.l.b16 %v20
  %v57 = vunpack.c.l.b16 %v21
  %v58 = vpack.c.b16 %v57, %v56
  %v92 = vunpack.c.l.b16 %v22
  %v93 = vunpack.c.h.b16 %v22
  %v94 = vunpack.c.l.b16 %v23
  %v95 = vunpack.c.h.b16 %v23
  %v96 = vunpack.c.l.b16 %v24
  %v97 = vunpack.c.h.b16 %v24
  %v98 = vunpack.c.l.b16 %v25
  %v99 = vunpack.c.h.b16 %v25
  %v100 = vunpack.c.l.b16 %v26
  %v101 = vunpack.c.h.b16 %v26
  %v102 = vunpack.c.l.b16 %v27
  %v103 = vunpack.c.h.b16 %v27
  %v104 = vunpack.c.l.b16 %v28
  %v105 = vunpack.c.h.b16 %v28
  %v106 = vunpack.c.l.b16 %v29
  %v107 = vunpack.c.h.b16 %v29
  %v108 = vunpack.c.l.b16 %v30
  %v109 = vunpack.c.h.b16 %v30
  %v110 = vunpack.c.l.b16 %v31
  %v111 = vunpack.c.h.b16 %v31
  %v112 = vunpack.c.l.b16 %v32
  %v113 = vunpack.c.h.b16 %v32
  %v114 = vunpack.c.l.b16 %v33
  %v115 = vunpack.c.h.b16 %v33
  %v116 = vunpack.c.l.b16 %v34
  %v117 = vunpack.c.h.b16 %v34
  %v118 = vunpack.c.l.b16 %v35
  %v119 = vunpack.c.h.b16 %v35
  %v120 = vunpack.c.l.b16 %v36
  %v121 = vunpack.c.h.b16 %v36
  %v122 = vunpack.c.l.b16 %v37
  %v123 = vunpack.c.h.b16 %v37
  %v124 = vunpack.c.l.b16 %v38
  %v125 = vunpack.c.h.b16 %v38
  %v126 = vunpack.c.l.b16 %v39
  %v127 = vunpack.c.h.b16 %v39
  %v128 = vunpack.c.l.b16 %v40
  %v129 = vunpack.c.h.b16 %v40
  %v130 = vunpack.c.l.b16 %v41
  %v131 = vunpack.c.h.b16 %v41
  %v132 = vunpack.c.l.b16 %v42
  %v133 = vunpack.c.h.b16 %v42
  %v134 = vunpack.c.l.b16 %v43
  %v135 = vunpack.c.h.b16 %v43
  %v136 = vunpack.c.l.b16 %v44
  %v137 = vunpack.c.h.b16 %v44
  %v138 = vunpack.c.l.b16 %v45
  %v139 = vunpack.c.h.b16 %v45
  %v140 = vunpack.c.l.b16 %v46
  %v141 = vunpack.c.h.b16 %v46
  %v142 = vunpack.c.l.b16 %v47
  %v143 = vunpack.c.h.b16 %v47
  %v144 = vunpack.c.l.b16 %v48
  %v145 = vunpack.c.h.b16 %v48
  %v146 = vunpack.c.l.b16 %v49
  %v147 = vunpack.c.h.b16 %v49
  %v148 = vunpack.c.l.b16 %v50
  %v149 = vunpack.c.h.b16 %v50
  %v150 = vunpack.c.l.b16 %v51
  %v151 = vunpack.c.h.b16 %v51
  %v152 = vunpack.c.l.b16 %v52
  %v153 = vunpack.c.h.b16 %v52
  %v154 = vunpack.c.l.b16 %v53
  %v155 = vunpack.c.h.b16 %v53
  %v156 = vpack.c.b16 %v96, %v92
  %v157 = vpack.c.b16 %v97, %v93
  %v158 = vpack.c.b16 %v98, %v94
  %v159 = vpack.c.b16 %v99, %v95
  %v160 = vpack.c.b16 %v104, %v100
  %v161 = vpack.c.b16 %v105, %v101
  %v162 = vpack.c.b16 %v106, %v102
  %v163 = vpack.c.b16 %v107, %v103
  %v164 = vpack.c.b16 %v112, %v108
  %v165 = vpack.c.b16 %v113, %v109
  %v166 = vpack.c.b16 %v114, %v110
  %v167 = vpack.c.b16 %v115, %v111
  %v168 = vpack.c.b16 %v120, %v116
  %v169 = vpack.c.b16 %v121, %v117
  %v170 = vpack.c.b16 %v122, %v118
  %v171 = vpack.c.b16 %v123, %v119
  %v172 = vpack.c.b16 %v128, %v124
  %v173 = vpack.c.b16 %v129, %v125
  %v174 = vpack.c.b16 %v130, %v126
  %v175 = vpack.c.b16 %v131, %v127
  %v176 = vpack.c.b16 %v136, %v132
  %v177 = vpack.c.b16 %v137, %v133
  %v178 = vpack.c.b16 %v138, %v134
  %v179 = vpack.c.b16 %v139, %v135
  %v180 = vpack.c.b16 %v144, %v140
  %v181 = vpack.c.b16 %v145, %v141
  %v182 = vpack.c.b16 %v146, %v142
  %v183 = vpack.c.b16 %v147, %v143
  %v184 = vpack.c.b16 %v152, %v148
  %v185 = vpack.c.b16 %v153, %v149
  %v186 = vpack.c.b16 %v154, %v150
  %v187 = vpack.c.b16 %v155, %v151
  %220 = vmatpush.bf16.msra.mxu0 %v184
  %221 = vmatpush.bf16.msra.mxu0 %v180
  %222 = vmatpush.bf16.msra.mxu0 %v176
  %223 = vmatpush.bf16.msra.mxu0 %v172
  %224 = vmatpush.bf16.msra.mxu0 %v168
  %225 = vmatpush.bf16.msra.mxu0 %v164
  %226 = vmatpush.bf16.msra.mxu0 %v160
  %227 = vmatpush.bf16.msra.mxu0 %v156
  %228 = vmatmul.bf16.gmra.mxu0 %v58
  %v229 = vpop.f32.mrf.mxu0
  %v230 = vadd.f32 0.0, %v229
  %v231 = vpop.f32.mrf.mxu0
  %v232 = vadd.f32 0.0, %v231
  %233 = vdwg.mxu0
  %234 = vmatpush.bf16.msra.mxu0 %v185
  %235 = vmatpush.bf16.msra.mxu0 %v181
  %236 = vmatpush.bf16.msra.mxu0 %v177
  %237 = vmatpush.bf16.msra.mxu0 %v173
  %238 = vmatpush.bf16.msra.mxu0 %v169
  %239 = vmatpush.bf16.msra.mxu0 %v165
  %240 = vmatpush.bf16.msra.mxu0 %v161
  %241 = vmatpush.bf16.msra.mxu0 %v157
  %242 = vmatmul.bf16.gmra.mxu0 %v58
  %v243 = vpop.f32.mrf.mxu0
  %v244 = vadd.f32 0.0, %v243
  %v245 = vpop.f32.mrf.mxu0
  %v246 = vadd.f32 0.0, %v245
  %247 = vdwg.mxu0
  %248 = vmatpush.bf16.msra.mxu0 %v186
  %249 = vmatpush.bf16.msra.mxu0 %v182
  %250 = vmatpush.bf16.msra.mxu0 %v178
  %251 = vmatpush.bf16.msra.mxu0 %v174
  %252 = vmatpush.bf16.msra.mxu0 %v170
  %253 = vmatpush.bf16.msra.mxu0 %v166
  %254 = vmatpush.bf16.msra.mxu0 %v162
  %255 = vmatpush.bf16.msra.mxu0 %v158
  %256 = vmatmul.bf16.gmra.mxu0 %v58
  %v257 = vpop.f32.mrf.mxu0
  %v258 = vadd.f32 0.0, %v257
  %v259 = vpop.f32.mrf.mxu0
  %v260 = vadd.f32 0.0, %v259
  %261 = vdwg.mxu0
  %262 = vmatpush.bf16.msra.mxu0 %v187
  %263 = vmatpush.bf16.msra.mxu0 %v183
  %264 = vmatpush.bf16.msra.mxu0 %v179
  %265 = vmatpush.bf16.msra.mxu0 %v175
  %266 = vmatpush.bf16.msra.mxu0 %v171
  %267 = vmatpush.bf16.msra.mxu0 %v167
  %268 = vmatpush.bf16.msra.mxu0 %v163
  %269 = vmatpush.bf16.msra.mxu0 %v159
  %270 = vmatmul.bf16.gmra.mxu0 %v58
  %v271 = vpop.f32.mrf.mxu0
  %v272 = vadd.f32 0.0, %v271
  %v273 = vpop.f32.mrf.mxu0
  %v274 = vadd.f32 0.0, %v273
  %275 = vdwg.mxu0
  %v276 = vld [vmem:[%s2] sm:$0xf]
  %v278 = vperm.slane %v276, 0
  %v279 = vperm.slane %v276, 1
  %v280 = vperm.slane %v276, 2
  %v281 = vperm.slane %v276, 3
  %v286 = vmul.f32 %v230, %v278
  %v287 = vmul.f32 %v244, %v279
  %v288 = vmul.f32 %v258, %v280
  %v289 = vmul.f32 %v272, %v281
  %v290 = vmul.f32 %v232, %v278
  %v291 = vmul.f32 %v246, %v279
  %v292 = vmul.f32 %v260, %v280
  %v293 = vmul.f32 %v274, %v281
  %v294 = vadd.f32 %v286, %v287
  %v295 = vadd.f32 %v294, %v288
  %v296 = vadd.f32 %v295, %v289
  %297 = vadd.xlane.f32.xlu0 %v296
  %v298 = vpop.xlane.xlu0 %297
  %v299 = vadd.f32 %v290, %v291
  %v300 = vadd.f32 %v299, %v292
  %v301 = vadd.f32 %v300, %v293
  %302 = vadd.xlane.f32.xlu0 %v301
  %v303 = vpop.xlane.xlu0 %302
  %vm304 = vcmask 7168
  %305 = vst.msk [vmem:[%s5] sm:$0xff] %vm304, %v298
  %306 = vst.msk [vmem:[%s5 + $0x8] sm:$0xff] %vm304, %v303
  %v307 = vld [vmem:[%s3] sm:$0xf]
  %v309 = vperm.slane %v307, 0
  %v310 = vperm.slane %v307, 1
  %v311 = vperm.slane %v307, 2
  %v312 = vperm.slane %v307, 3
  %v317 = vmul.f32 %v230, %v309
  %v318 = vmul.f32 %v244, %v310
  %v319 = vmul.f32 %v258, %v311
  %v320 = vmul.f32 %v272, %v312
  %v321 = vmul.f32 %v232, %v309
  %v322 = vmul.f32 %v246, %v310
  %v323 = vmul.f32 %v260, %v311
  %v324 = vmul.f32 %v274, %v312
  %v325 = vadd.f32 %v317, %v318
  %v326 = vadd.f32 %v325, %v319
  %v327 = vadd.f32 %v326, %v320
  %328 = vadd.xlane.f32.xlu0 %v327
  %v329 = vpop.xlane.xlu0 %328
  %v330 = vadd.f32 %v321, %v322
  %v331 = vadd.f32 %v330, %v323
  %v332 = vadd.f32 %v331, %v324
  %333 = vadd.xlane.f32.xlu0 %v332
  %v334 = vpop.xlane.xlu0 %333
  %335 = vst.msk [vmem:[%s6] sm:$0xff] %vm304, %v329
  %336 = vst.msk [vmem:[%s6 + $0x8] sm:$0xff] %vm304, %v334
  %v337 = vpack.c.bf16 %v244, %v230
  %v338 = vpack.c.bf16 %v272, %v258
  %v339 = vpack.c.bf16 %v246, %v232
  %v340 = vpack.c.bf16 %v274, %v260
  %341 = vst [vmem:[%s4] sm:$0xff] %v337
  %342 = vst [vmem:[%s4 + $0x8] sm:$0xff] %v338
  %343 = vst [vmem:[%s4 + $0x10] sm:$0xff] %v339
  %344 = vst [vmem:[%s4 + $0x18] sm:$0xff] %v340
  // Predicated region
  $region18: #{gat_model.6} parent=0 // pred_check
    _
  $region19: #{gat_model.6} parent=0 // pred_check_branch
    %346 = sbr.rel (0) target = $region21
  $region20: #{gat_model.6} parent=0 // pred_region
    _
  $region21: #{gat_model.6} parent=0 // pred_fallthru
    _
  // Predicated region
  $region22: #{gat_model.6} parent=0 // pred_check
    _
  $region23: #{gat_model.6} parent=0 // pred_check_branch
    %348 = sbr.rel (0) target = $region25
  $region24: #{gat_model.6} parent=0 // pred_region
    _
  $region25: #{gat_model.6} parent=0 // pred_fallthru
    _
  // Predicated region
  $region26: #{gat_model.6} parent=0 // pred_check
    _
  $region27: #{gat_model.6} parent=0 // pred_check_branch
    %350 = sbr.rel (0) target = $region29
  $region28: #{gat_model.6} parent=0 // pred_region
    _
  $region29: #{gat_model.6} parent=0 // pred_fallthru
    _
  // Predicated region
  $region30: #{gat_model.6} parent=0 // pred_check
    _
  $region31: #{gat_model.6} parent=0 // pred_check_branch
    %352 = sbr.rel (0) target = $region33
  $region32: #{gat_model.6} parent=0 // pred_region
    _
  $region33: #{gat_model.6} parent=0 // pred_fallthru
    _
  // Predicated region
  $region34: #{gat_model.6} parent=0 // pred_check
    _
  $region35: #{gat_model.6} parent=0 // pred_check_branch
    %354 = sbr.rel (0) target = $region37
  $region36: #{gat_model.6} parent=0 // pred_region
    _
  $region37: #{gat_model.6} parent=0 // pred_fallthru
    _
  // Predicated region
  $region38: #{gat_model.6} parent=0 // pred_check
    _
  $region39: #{gat_model.6} parent=0 // pred_check_branch
    %356 = sbr.rel (0) target = $region41
  $region40: #{gat_model.6} parent=0 // pred_region
    _
  $region41: #{gat_model.6} parent=0 // pred_fallthru
    _

</llo_original>
